<compile_context>
chip_gen: v5e
topology: v5e:2x2
jax: 0.10.0
libtpu: 0.0.40
codegen_flags: <defaults>
</compile_context>

<pallas_src>
import functools

import jax
import jax.numpy as jnp
from jax.experimental import pallas as pl
from jax.experimental.pallas import tpu as pltpu

_LANE = 128      # vreg lane width: last dim should be a multiple of this
_SUBLANE = 8     # vreg sublane count: second-to-last dim alignment
_VMEM_LIMIT = 32 * 1024 * 1024   # safe scoped-VMEM ceiling on v5e/v6e/v7x


def _round_up(x, m):
    return (x + m - 1) // m * m


def _pad2d(a, rows, cols):
    r, c = a.shape
    if r == rows and c == cols:
        return a
    return jnp.pad(a, ((0, rows - r), (0, cols - c)))


# ---------------------------------------------------------------------------
# Fused path: both GraphConvolution layers in one kernel (small graphs).
# ---------------------------------------------------------------------------
def _gcn_fused_kernel(x_ref, adj_ref, w1_ref, b1_ref, w2_ref, b2_ref, o_ref):
    """out = adj @ ((relu(adj @ (x@w1) + b1)) @ w2) + b2, all f32 accum."""
    adj = adj_ref[...]
    s1 = jnp.dot(x_ref[...], w1_ref[...], preferred_element_type=jnp.float32)
    h = jnp.dot(adj, s1, preferred_element_type=jnp.float32) + b1_ref[...]
    h = jnp.maximum(h, 0.0)
    # F.dropout in eval mode is the identity (training handled in wrapper).
    s2 = jnp.dot(h, w2_ref[...], preferred_element_type=jnp.float32)
    out = jnp.dot(adj, s2, preferred_element_type=jnp.float32) + b2_ref[...]
    o_ref[...] = out.astype(o_ref.dtype)


def _gcn_forward_fused(x, adj, w1, b1, w2, b2):
    n, f_in = x.shape
    f_hid = w1.shape[1]
    f_out = w2.shape[1]

    # Pad N to a lane multiple too: adj is both a matmul operand and has its
    # last dim on lanes; 128-alignment keeps every load/matmul unmasked.
    n_p = _round_up(n, _LANE)
    f_in_p = _round_up(f_in, _LANE)
    f_hid_p = _round_up(f_hid, _LANE)
    f_out_p = _round_up(f_out, _LANE)

    x_p = _pad2d(x, n_p, f_in_p)
    adj_p = _pad2d(adj, n_p, n_p)
    w1_p = _pad2d(w1, f_in_p, f_hid_p)
    b1_p = _pad2d(b1, 1, f_hid_p)
    w2_p = _pad2d(w2, f_hid_p, f_out_p)
    b2_p = _pad2d(b2, 1, f_out_p)

    flops = (2 * n_p * f_in_p * f_hid_p + 2 * n_p * n_p * f_hid_p
             + 2 * n_p * f_hid_p * f_out_p + 2 * n_p * n_p * f_out_p)
    bytes_accessed = 4 * (x_p.size + adj_p.size + w1_p.size + b1_p.size
                          + w2_p.size + b2_p.size + n_p * f_out_p)

    vmem = pl.BlockSpec(memory_space=pltpu.MemorySpace.VMEM)
    out_p = pl.pallas_call(
        _gcn_fused_kernel,
        out_shape=jax.ShapeDtypeStruct((n_p, f_out_p), x.dtype),
        in_specs=[vmem] * 6,
        out_specs=vmem,
        compiler_params=pltpu.CompilerParams(vmem_limit_bytes=_VMEM_LIMIT),
        cost_estimate=pl.CostEstimate(
            flops=flops, transcendentals=0, bytes_accessed=bytes_accessed),
    )(x_p, adj_p, w1_p, b1_p, w2_p, b2_p)
    return out_p[:n, :f_out]


# ---------------------------------------------------------------------------
# Tiled path kernels (large graphs).
# ---------------------------------------------------------------------------
def _support_kernel(x_ref, w_ref, o_ref):
    o_ref[...] = jnp.dot(
        x_ref[...], w_ref[...],
        preferred_element_type=jnp.float32).astype(o_ref.dtype)


def _agg_relu_proj_kernel(adj_ref, s_ref, b_ref, w_ref, o_ref, acc_ref):
    """o = relu(adj @ s + b) @ w ; contraction over grid axis 1."""
    k = pl.program_id(1)

    @pl.when(k == 0)
    def _init():
        acc_ref[...] = jnp.zeros_like(acc_ref)

    acc_ref[...] += jnp.dot(adj_ref[...], s_ref[...],
                            preferred_element_type=jnp.float32)

    @pl.when(k == pl.num_programs(1) - 1)
    def _finalize():
        h = jnp.maximum(acc_ref[...] + b_ref[...], 0.0)
        # Layer-2 "support" projection fused here: the [N, F_hid] hidden
        # activation never leaves VMEM.
        o_ref[...] = jnp.dot(h, w_ref[...],
                             preferred_element_type=jnp.float32).astype(o_ref.dtype)


def _agg_bias_kernel(adj_ref, s_ref, b_ref, o_ref, acc_ref):
    """o = adj @ s + b ; contraction over grid axis 1."""
    k = pl.program_id(1)

    @pl.when(k == 0)
    def _init():
        acc_ref[...] = jnp.zeros_like(acc_ref)

    acc_ref[...] += jnp.dot(adj_ref[...], s_ref[...],
                            preferred_element_type=jnp.float32)

    @pl.when(k == pl.num_programs(1) - 1)
    def _finalize():
        o_ref[...] = (acc_ref[...] + b_ref[...]).astype(o_ref.dtype)


def _support(x, w, *, tile):
    """support = x @ w, row-tiled. Inputs pre-padded."""
    n, f_in = x.shape
    f_out = w.shape[1]
    n_tiles = n // tile
    return pl.pallas_call(
        _support_kernel,
        out_shape=jax.ShapeDtypeStruct((n, f_out), jnp.float32),
        grid_spec=pltpu.PrefetchScalarGridSpec(
            num_scalar_prefetch=0,
            grid=(n_tiles,),
            in_specs=[pl.BlockSpec((tile, f_in), lambda i: (i, 0)),
                      pl.BlockSpec((f_in, f_out), lambda i: (0, 0))],
            out_specs=pl.BlockSpec((tile, f_out), lambda i: (i, 0)),
        ),
        compiler_params=pltpu.CompilerParams(
            dimension_semantics=("parallel",),
            vmem_limit_bytes=_VMEM_LIMIT),
        cost_estimate=pl.CostEstimate(
            flops=2 * n * f_in * f_out, transcendentals=0,
            bytes_accessed=4 * (n * f_in + f_in * f_out + n * f_out)),
    )(x, w)


def _aggregate(adj, s, b, w_next, out_dtype, *, tile):
    """If w_next is None: adj @ s + b.  Else: relu(adj @ s + b) @ w_next.

    Row-tile axis "parallel" (megacore), contraction axis "arbitrary" with an
    f32 VMEM accumulator; bias/ReLU/projection run only in the finalize.
    """
    n = adj.shape[0]
    f_in = s.shape[1]
    n_tiles = n // tile

    adj_spec = pl.BlockSpec((tile, tile), lambda i, k: (i, k))
    s_spec = pl.BlockSpec((tile, f_in), lambda i, k: (k, 0))
    b_spec = pl.BlockSpec((1, f_in), lambda i, k: (0, 0))

    if w_next is not None:
        f_out = w_next.shape[1]
        kernel = _agg_relu_proj_kernel
        in_specs = [adj_spec, s_spec, b_spec,
                    pl.BlockSpec((f_in, f_out), lambda i, k: (0, 0))]
        args = (adj, s, b, w_next)
        extra_flops = 2 * n * f_in * f_out
    else:
        f_out = f_in
        kernel = _agg_bias_kernel
        in_specs = [adj_spec, s_spec, b_spec]
        args = (adj, s, b)
        extra_flops = 0

    return pl.pallas_call(
        kernel,
        out_shape=jax.ShapeDtypeStruct((n, f_out), out_dtype),
        grid_spec=pltpu.PrefetchScalarGridSpec(
            num_scalar_prefetch=0,
            grid=(n_tiles, n_tiles),
            in_specs=in_specs,
            out_specs=pl.BlockSpec((tile, f_out), lambda i, k: (i, 0)),
            scratch_shapes=[pltpu.VMEM((tile, f_in), jnp.float32)],
        ),
        compiler_params=pltpu.CompilerParams(
            dimension_semantics=("parallel", "arbitrary"),
            vmem_limit_bytes=_VMEM_LIMIT),
        cost_estimate=pl.CostEstimate(
            flops=2 * n * n * f_in + extra_flops, transcendentals=0,
            bytes_accessed=4 * (n * n + n * f_in + n * f_out + f_in)),
    )(*args)


def _gcn_forward_tiled(x, adj, w1, b1, w2, b2, *, tile=256):
    # tile is tunable per generation: 128 suits v5e's 4x128^2 MXU;
    # 256/512 suit v6e/v7x's 2x256^2 MXU (keep buffers well inside scoped VMEM).
    n, f_in = x.shape
    f_hid = w1.shape[1]
    f_out = w2.shape[1]

    tile = min(tile, _round_up(n, _LANE))   # keep tile a multiple of 128
    n_p = _round_up(n, tile)
    f_in_p = _round_up(f_in, _LANE)
    f_hid_p = _round_up(f_hid, _LANE)
    f_out_p = _round_up(f_out, _LANE)

    x_p = _pad2d(x, n_p, f_in_p)
    adj_p = _pad2d(adj, n_p, n_p)
    w1_p = _pad2d(w1, f_in_p, f_hid_p)
    b1_p = _pad2d(b1, 1, f_hid_p)
    w2_p = _pad2d(w2, f_hid_p, f_out_p)
    b2_p = _pad2d(b2, 1, f_out_p)

    # (1) support1 = x @ W1
    s1 = _support(x_p, w1_p, tile=tile)
    # (2) s2 = relu(adj @ support1 + b1) @ W2   (hidden h never hits HBM)
    s2 = _aggregate(adj_p, s1, b1_p, w2_p, jnp.float32, tile=tile)
    # (3) out = adj @ s2 + b2
    out = _aggregate(adj_p, s2, b2_p, None, x.dtype, tile=tile)
    return out[:n, :f_out]


# ---------------------------------------------------------------------------
# Public forward + params.
# ---------------------------------------------------------------------------
def gcn_forward(x, adj, params, dropout_p=0.5, training=False, tile=256):
    """GCN.forward: relu(gc1(x, adj)) -> dropout -> gc2(x, adj)."""
    if training and dropout_p > 0.0:
        # TODO(synk): in-kernel Bernoulli dropout (pltpu.prng_random_bits) for training mode.
        raise NotImplementedError(
            "training-mode dropout not implemented; run in eval mode")
    w1, b1, w2, b2 = params

    n = x.shape[0]
    n_p = _round_up(n, _LANE)
    f_in_p = _round_up(w1.shape[0], _LANE)
    f_hid_p = _round_up(w1.shape[1], _LANE)
    f_out_p = _round_up(w2.shape[1], _LANE)
    resident_bytes = 4 * (n_p * n_p
                          + n_p * (f_in_p + 2 * f_hid_p + 2 * f_out_p)
                          + f_in_p * f_hid_p + f_hid_p * f_out_p)
    # Fused single-dispatch path while the whole padded problem comfortably
    # fits scoped VMEM (adj dominates); otherwise tile/pipeline over adj.
    if resident_bytes <= 12 * 1024 * 1024:
        return _gcn_forward_fused(x, adj, w1, b1, w2, b2)
    return _gcn_forward_tiled(x, adj, w1, b1, w2, b2, tile=tile)


def init_gcn_params(key, input_dim, hidden_dim, out_dim, dtype=jnp.float32):
    """Uniform init matching GraphConvolution parameter shapes."""
    k1, k2, k3, k4 = jax.random.split(key, 4)
    s1 = 1.0 / jnp.sqrt(jnp.asarray(hidden_dim, dtype))
    s2 = 1.0 / jnp.sqrt(jnp.asarray(out_dim, dtype))
    w1 = jax.random.uniform(k1, (input_dim, hidden_dim), dtype, -s1, s1)
    b1 = jax.random.uniform(k2, (1, hidden_dim), dtype, -s1, s1)
    w2 = jax.random.uniform(k3, (hidden_dim, out_dim), dtype, -s2, s2)
    b2 = jax.random.uniform(k4, (1, out_dim), dtype, -s2, s2)
    return w1, b1, w2, b2


if __name__ == "__main__":
    key = jax.random.PRNGKey(0)
    k_x1, k_a1, k_p1, k_x2, k_a2, k_p2 = jax.random.split(key, 6)

    def make_adj(k, n):
        a = jax.random.uniform(k, (n, n), jnp.float32)
        a = (a > 0.7).astype(jnp.float32)
        a = jnp.maximum(a, a.T) + jnp.eye(n, dtype=jnp.float32)
        d = 1.0 / jnp.sqrt(a.sum(axis=-1))
        return d[:, None] * a * d[None, :]

    def ref_gcn(x, adj, params):
        w1, b1, w2, b2 = params
        hp = jax.lax.Precision.HIGHEST
        h = jnp.maximum(
            jnp.dot(adj, jnp.dot(x, w1, precision=hp), precision=hp) + b1, 0.0)
        return jnp.dot(adj, jnp.dot(h, w2, precision=hp), precision=hp) + b2

    # --- Small graph: exercises the fused single-kernel path. ---
    N1, F_IN1, F_HID1, F_OUT1 = 16, 32, 32, 8
    x1 = jax.random.normal(k_x1, (N1, F_IN1), jnp.float32)
    adj1 = make_adj(k_a1, N1)
    params1 = init_gcn_params(k_p1, F_IN1, F_HID1, F_OUT1)
    out1 = jax.block_until_ready(
        gcn_forward(x1, adj1, params1, dropout_p=0.5, training=False))
    ref1 = ref_gcn(x1, adj1, params1)
    assert out1.shape == (N1, F_OUT1)
    assert jnp.allclose(out1, ref1, atol=1e-4, rtol=1e-4)

    # --- Larger graph: exercises the tiled / pipelined path. ---
    N2, F_IN2, F_HID2, F_OUT2 = 512, 96, 64, 48
    x2 = jax.random.normal(k_x2, (N2, F_IN2), jnp.float32)
    adj2 = make_adj(k_a2, N2)
    params2 = init_gcn_params(k_p2, F_IN2, F_HID2, F_OUT2)
    w1, b1, w2, b2 = params2
    out2 = jax.block_until_ready(
        _gcn_forward_tiled(x2, adj2, w1, b1, w2, b2, tile=256))
    ref2 = ref_gcn(x2, adj2, params2)
    assert out2.shape == (N2, F_OUT2)
    assert jnp.allclose(out2, ref2, atol=1e-4, rtol=1e-4)

    print("KERNEL_OK")
</pallas_src>

<mosaic_0001>
module attributes {stable_mosaic.version = 11 : i64} {
  func.func @_gcn_fused_kernel(%arg0: memref<128x128xf32, #tpu.memory_space<vmem>>, %arg1: memref<128x128xf32, #tpu.memory_space<vmem>>, %arg2: memref<128x128xf32, #tpu.memory_space<vmem>>, %arg3: memref<1x128xf32, #tpu.memory_space<vmem>>, %arg4: memref<128x128xf32, #tpu.memory_space<vmem>>, %arg5: memref<1x128xf32, #tpu.memory_space<vmem>>, %arg6: memref<128x128xf32, #tpu.memory_space<vmem>>) attributes {dimension_semantics = [], scalar_prefetch = 0 : i64, scratch_operands = 0 : i64, tpu.core_type = #tpu.core_type<tc>} {
    %c0 = arith.constant 0 : index
    %c0_0 = arith.constant 0 : index
    %0 = vector.load %arg1[%c0, %c0_0] : memref<128x128xf32, #tpu.memory_space<vmem>>, vector<128x128xf32>
    %c0_1 = arith.constant 0 : index
    %c0_2 = arith.constant 0 : index
    %1 = vector.load %arg0[%c0_1, %c0_2] : memref<128x128xf32, #tpu.memory_space<vmem>>, vector<128x128xf32>
    %c0_3 = arith.constant 0 : index
    %c0_4 = arith.constant 0 : index
    %2 = vector.load %arg2[%c0_3, %c0_4] : memref<128x128xf32, #tpu.memory_space<vmem>>, vector<128x128xf32>
    %cst = arith.constant dense<0.000000e+00> : vector<128x128xf32>
    %3 = tpu.matmul %1, %2, %cst {dimension_numbers = #tpu.dot_dimension_numbers<[1], [0], [0], [1], [0, 0, 1, 1], [], []>} : vector<128x128xf32>, vector<128x128xf32>, vector<128x128xf32> -> vector<128x128xf32>
    %cst_5 = arith.constant dense<0.000000e+00> : vector<128x128xf32>
    %4 = tpu.matmul %0, %3, %cst_5 {dimension_numbers = #tpu.dot_dimension_numbers<[1], [0], [0], [1], [0, 0, 1, 1], [], []>} : vector<128x128xf32>, vector<128x128xf32>, vector<128x128xf32> -> vector<128x128xf32>
    %c0_6 = arith.constant 0 : index
    %c0_7 = arith.constant 0 : index
    %5 = vector.load %arg3[%c0_6, %c0_7] : memref<1x128xf32, #tpu.memory_space<vmem>>, vector<1x128xf32>
    %6 = vector.broadcast %5 : vector<1x128xf32> to vector<128x128xf32>
    %7 = arith.addf %4, %6 : vector<128x128xf32>
    %cst_8 = arith.constant 0.000000e+00 : f32
    %8 = vector.broadcast %cst_8 : f32 to vector<128x128xf32>
    %9 = arith.maximumf %7, %8 : vector<128x128xf32>
    %c0_9 = arith.constant 0 : index
    %c0_10 = arith.constant 0 : index
    %10 = vector.load %arg4[%c0_9, %c0_10] : memref<128x128xf32, #tpu.memory_space<vmem>>, vector<128x128xf32>
    %cst_11 = arith.constant dense<0.000000e+00> : vector<128x128xf32>
    %11 = tpu.matmul %9, %10, %cst_11 {dimension_numbers = #tpu.dot_dimension_numbers<[1], [0], [0], [1], [0, 0, 1, 1], [], []>} : vector<128x128xf32>, vector<128x128xf32>, vector<128x128xf32> -> vector<128x128xf32>
    %cst_12 = arith.constant dense<0.000000e+00> : vector<128x128xf32>
    %12 = tpu.matmul %0, %11, %cst_12 {dimension_numbers = #tpu.dot_dimension_numbers<[1], [0], [0], [1], [0, 0, 1, 1], [], []>} : vector<128x128xf32>, vector<128x128xf32>, vector<128x128xf32> -> vector<128x128xf32>
    %c0_13 = arith.constant 0 : index
    %c0_14 = arith.constant 0 : index
    %13 = vector.load %arg5[%c0_13, %c0_14] : memref<1x128xf32, #tpu.memory_space<vmem>>, vector<1x128xf32>
    %14 = vector.broadcast %13 : vector<1x128xf32> to vector<128x128xf32>
    %15 = arith.addf %12, %14 : vector<128x128xf32>
    %c0_15 = arith.constant 0 : index
    %c0_16 = arith.constant 0 : index
    %16 = vector.load %arg6[%c0_15, %c0_16] : memref<128x128xf32, #tpu.memory_space<vmem>>, vector<128x128xf32>
    tpu.vector_store %arg6[%c0_15, %c0_16], %15 {strides = array<i32>} : memref<128x128xf32, #tpu.memory_space<vmem>>, vector<128x128xf32>,
    return
  }
}

</mosaic_0001>

<llo_original>
// kernel: tpu_custom_call.1
$region0: #{tpu_custom_call.1}
  #allocation0 [shape = 'u32[]', space=smem, size = 0x4, offset = 0x4, fixed_abs, tag = 'smem constant byte address 0x4 - core index']
  #allocation1 [shape = 'u32[72,128]{1,0:T(1,128)}', space=vmem, size = 0x9000, scoped, tag = 'internal scratch']
  %s0 = inlined_call_operand.hbm [shape: f32[128,128], index: 0, kind: input, shape index: {}]
  %s1 = inlined_call_operand.hbm [shape: f32[128,128], index: 1, kind: input, shape index: {}]
  %s2 = inlined_call_operand.hbm [shape: f32[128,128], index: 2, kind: input, shape index: {}]
  %s3 = inlined_call_operand.vmem [shape: f32[1,128], index: 3, kind: input, shape index: {}]
  %s4 = inlined_call_operand.hbm [shape: f32[128,128], index: 4, kind: input, shape index: {}]
  %s5 = inlined_call_operand.vmem [shape: f32[1,128], index: 5, kind: input, shape index: {}]
  %s6 = inlined_call_operand.hbm [shape: f32[128,128], index: 6, kind: output, shape index: {}]
  %s7 = sld [smem:[#allocation0]]
  $region50: #{tpu_custom_call.1} parent=0
    _
  %s9 = ssub.s32 1, %s7
  %s10 = scalar_select 0, %s9, %s7
  $region1: #{tpu_custom_call.1} parent=0
    #allocation2 [shape = 'u8[65536]{0}', space=vmem, size = 0x10000, scoped, tag = 'input window, operand 0, single buffered']
    #allocation3 [shape = 's32[1]{0}', space=sflag, size = 0x4, scoped, tag = 'scoped memory for tpu_custom_call.1']
    #allocation4 [shape = 's32[1]{0}', space=sflag, size = 0x4, scoped, tag = 'scoped memory for tpu_custom_call.1']
    #allocation5 [shape = 'u8[65536]{0}', space=vmem, size = 0x10000, scoped, tag = 'input window, operand 1, single buffered']
    #allocation6 [shape = 's32[1]{0}', space=sflag, size = 0x4, scoped, tag = 'scoped memory for tpu_custom_call.1']
    #allocation7 [shape = 'u8[65536]{0}', space=vmem, size = 0x10000, scoped, tag = 'input window, operand 2, single buffered']
    #allocation8 [shape = 'u8[65536]{0}', space=vmem, size = 0x10000, scoped, tag = 'input window, operand 4, single buffered']
    #allocation9 [shape = 's32[1]{0}', space=sflag, size = 0x4, scoped, tag = 'scoped memory for tpu_custom_call.1']
    #allocation10 [shape = 'u8[65536]{0}', space=vmem, size = 0x10000, scoped, tag = 'output window, operand 0, single buffered']
    %11 = vsyncpa [#allocation3], 0
    %12 = vsyncpa [#allocation6], 0
    %13 = vsyncpa [#allocation9], 0
    %14 = vsyncpa [#allocation4], 0
    // Predicated region
    $region2: #{tpu_custom_call.1} parent=1 // pred_check
      _
    $region3: #{tpu_custom_call.1} parent=1 // pred_check_branch
      %16 = sbr.rel (0) target = $region5
    $region4: #{tpu_custom_call.1} parent=1 // pred_region
      %18 = vsyncadd [#allocation3], 0
      %s19 = sshll.u32 %s0, 4
      %s20 = int_to_ptr.hbm [resolvable:$true] %s19
      %s21 = sshll.u32 [#allocation2], 4
      %s22 = int_to_ptr.vmem [resolvable:$true] %s21
      %27 = dma.hbm_to_vmem [thread:$0]  %s20, 2048, %s22, [#allocation3], 128, 128, 8
    $region5: #{tpu_custom_call.1} parent=1 // pred_fallthru
      _
    // Predicated region
    $region6: #{tpu_custom_call.1} parent=1 // pred_check
      _
    $region7: #{tpu_custom_call.1} parent=1 // pred_check_branch
      %29 = sbr.rel (0) target = $region9
    $region8: #{tpu_custom_call.1} parent=1 // pred_region
      %31 = vsyncadd [#allocation6], 0
      %s32 = sshll.u32 %s1, 4
      %s33 = int_to_ptr.hbm [resolvable:$true] %s32
      %s34 = sshll.u32 [#allocation5], 4
      %s35 = int_to_ptr.vmem [resolvable:$true] %s34
      %40 = dma.hbm_to_vmem [thread:$0]  %s33, 2048, %s35, [#allocation6], 128, 128, 8
    $region9: #{tpu_custom_call.1} parent=1 // pred_fallthru
      _
    // Predicated region
    $region10: #{tpu_custom_call.1} parent=1 // pred_check
      _
    $region11: #{tpu_custom_call.1} parent=1 // pred_check_branch
      %42 = sbr.rel (0) target = $region13
    $region12: #{tpu_custom_call.1} parent=1 // pred_region
      %44 = vsyncadd [#allocation6], 0
      %s45 = sshll.u32 %s2, 4
      %s46 = int_to_ptr.hbm [resolvable:$true] %s45
      %s47 = sshll.u32 [#allocation7], 4
      %s48 = int_to_ptr.vmem [resolvable:$true] %s47
      %53 = dma.hbm_to_vmem [thread:$0]  %s46, 2048, %s48, [#allocation6], 128, 128, 8
    $region13: #{tpu_custom_call.1} parent=1 // pred_fallthru
      _
    // Predicated region
    $region14: #{tpu_custom_call.1} parent=1 // pred_check
      _
    $region15: #{tpu_custom_call.1} parent=1 // pred_check_branch
      %55 = sbr.rel (0) target = $region17
    $region16: #{tpu_custom_call.1} parent=1 // pred_region
      _
    $region17: #{tpu_custom_call.1} parent=1 // pred_fallthru
      _
    // Predicated region
    $region18: #{tpu_custom_call.1} parent=1 // pred_check
      _
    $region19: #{tpu_custom_call.1} parent=1 // pred_check_branch
      %57 = sbr.rel (0) target = $region21
    $region20: #{tpu_custom_call.1} parent=1 // pred_region
      %59 = vsyncadd [#allocation9], 0
      %s60 = sshll.u32 %s4, 4
      %s61 = int_to_ptr.hbm [resolvable:$true] %s60
      %s62 = sshll.u32 [#allocation8], 4
      %s63 = int_to_ptr.vmem [resolvable:$true] %s62
      %68 = dma.hbm_to_vmem [thread:$0]  %s61, 2048, %s63, [#allocation9], 128, 128, 8
    $region21: #{tpu_custom_call.1} parent=1 // pred_fallthru
      _
    // Predicated region
    $region22: #{tpu_custom_call.1} parent=1 // pred_check
      _
    $region23: #{tpu_custom_call.1} parent=1 // pred_check_branch
      %70 = sbr.rel (0) target = $region25
    $region24: #{tpu_custom_call.1} parent=1 // pred_region
      _
    $region25: #{tpu_custom_call.1} parent=1 // pred_fallthru
      _
    // Predicated region
    $region26: #{tpu_custom_call.1} parent=1 // pred_check
      _
    $region27: #{tpu_custom_call.1} parent=1 // pred_check_branch
      %72 = sbr.rel (0) target = $region29
    $region28: #{tpu_custom_call.1} parent=1 // pred_region
      %74 = dma.done [#allocation3], 2048
    $region29: #{tpu_custom_call.1} parent=1 // pred_fallthru
      _
    // Predicated region
    $region30: #{tpu_custom_call.1} parent=1 // pred_check
      _
    $region31: #{tpu_custom_call.1} parent=1 // pred_check_branch
      %76 = sbr.rel (0) target = $region33
    $region32: #{tpu_custom_call.1} parent=1 // pred_region
      %78 = dma.done [#allocation6], 2048
    $region33: #{tpu_custom_call.1} parent=1 // pred_fallthru
      _
    // Predicated region
    $region34: #{tpu_custom_call.1} parent=1 // pred_check
      _
    $region35: #{tpu_custom_call.1} parent=1 // pred_check_branch
      %80 = sbr.rel (0) target = $region37
    $region36: #{tpu_custom_call.1} parent=1 // pred_region
      %82 = dma.done [#allocation6], 2048
    $region37: #{tpu_custom_call.1} parent=1 // pred_fallthru
      _
    // Predicated region
    $region38: #{tpu_custom_call.1} parent=1 // pred_check
      _
    $region39: #{tpu_custom_call.1} parent=1 // pred_check_branch
      %84 = sbr.rel (0) target = $region41
    $region40: #{tpu_custom_call.1} parent=1 // pred_region
      %86 = dma.done [#allocation9], 2048
    $region41: #{tpu_custom_call.1} parent=1 // pred_fallthru
      _
    %v87 = vld [vmem:[#allocation5] sm:$0xff]
    %v88 = vld [vmem:[#allocation5 + $0x8] sm:$0xff]
    %v89 = vld [vmem:[#allocation5 + $0x10] sm:$0xff]
    %v90 = vld [vmem:[#allocation5 + $0x18] sm:$0xff]
    %v91 = vld [vmem:[#allocation5 + $0x20] sm:$0xff]
    %v92 = vld [vmem:[#allocation5 + $0x28] sm:$0xff]
    %v93 = vld [vmem:[#allocation5 + $0x30] sm:$0xff]
    %v94 = vld [vmem:[#allocation5 + $0x38] sm:$0xff]
    %v95 = vld [vmem:[#allocation5 + $0x40] sm:$0xff]
    %v96 = vld [vmem:[#allocation5 + $0x48] sm:$0xff]
    %v97 = vld [vmem:[#allocation5 + $0x50] sm:$0xff]
    %v98 = vld [vmem:[#allocation5 + $0x58] sm:$0xff]
    %v99 = vld [vmem:[#allocation5 + $0x60] sm:$0xff]
    %v100 = vld [vmem:[#allocation5 + $0x68] sm:$0xff]
    %v101 = vld [vmem:[#allocation5 + $0x70] sm:$0xff]
    %v102 = vld [vmem:[#allocation5 + $0x78] sm:$0xff]
    %v103 = vld [vmem:[#allocation2] sm:$0xff]
    %v104 = vld [vmem:[#allocation2 + $0x8] sm:$0xff]
    %v105 = vld [vmem:[#allocation2 + $0x10] sm:$0xff]
    %v106 = vld [vmem:[#allocation2 + $0x18] sm:$0xff]
    %v107 = vld [vmem:[#allocation2 + $0x20] sm:$0xff]
    %v108 = vld [vmem:[#allocation2 + $0x28] sm:$0xff]
    %v109 = vld [vmem:[#allocation2 + $0x30] sm:$0xff]
    %v110 = vld [vmem:[#allocation2 + $0x38] sm:$0xff]
    %v111 = vld [vmem:[#allocation2 + $0x40] sm:$0xff]
    %v112 = vld [vmem:[#allocation2 + $0x48] sm:$0xff]
    %v113 = vld [vmem:[#allocation2 + $0x50] sm:$0xff]
    %v114 = vld [vmem:[#allocation2 + $0x58] sm:$0xff]
    %v115 = vld [vmem:[#allocation2 + $0x60] sm:$0xff]
    %v116 = vld [vmem:[#allocation2 + $0x68] sm:$0xff]
    %v117 = vld [vmem:[#allocation2 + $0x70] sm:$0xff]
    %v118 = vld [vmem:[#allocation2 + $0x78] sm:$0xff]
    %v119 = vld [vmem:[#allocation7] sm:$0xff]
    %v120 = vld [vmem:[#allocation7 + $0x8] sm:$0xff]
    %v121 = vld [vmem:[#allocation7 + $0x10] sm:$0xff]
    %v122 = vld [vmem:[#allocation7 + $0x18] sm:$0xff]
    %v123 = vld [vmem:[#allocation7 + $0x20] sm:$0xff]
    %v124 = vld [vmem:[#allocation7 + $0x28] sm:$0xff]
    %v125 = vld [vmem:[#allocation7 + $0x30] sm:$0xff]
    %v126 = vld [vmem:[#allocation7 + $0x38] sm:$0xff]
    %v127 = vld [vmem:[#allocation7 + $0x40] sm:$0xff]
    %v128 = vld [vmem:[#allocation7 + $0x48] sm:$0xff]
    %v129 = vld [vmem:[#allocation7 + $0x50] sm:$0xff]
    %v130 = vld [vmem:[#allocation7 + $0x58] sm:$0xff]
    %v131 = vld [vmem:[#allocation7 + $0x60] sm:$0xff]
    %v132 = vld [vmem:[#allocation7 + $0x68] sm:$0xff]
    %v133 = vld [vmem:[#allocation7 + $0x70] sm:$0xff]
    %v134 = vld [vmem:[#allocation7 + $0x78] sm:$0xff]
    %135 = vmatpush.msra.mxu0 %v134
    %136 = vmatpush.msra.mxu0 %v133
    %137 = vmatpush.msra.mxu0 %v132
    %138 = vmatpush.msra.mxu0 %v131
    %139 = vmatpush.msra.mxu0 %v130
    %140 = vmatpush.msra.mxu0 %v129
    %141 = vmatpush.msra.mxu0 %v128
    %142 = vmatpush.msra.mxu0 %v127
    %143 = vmatpush.msra.mxu0 %v126
    %144 = vmatpush.msra.mxu0 %v125
    %145 = vmatpush.msra.mxu0 %v124
    %146 = vmatpush.msra.mxu0 %v123
    %147 = vmatpush.msra.mxu0 %v122
    %148 = vmatpush.msra.mxu0 %v121
    %149 = vmatpush.msra.mxu0 %v120
    %150 = vmatpush.msra.mxu0 %v119
    %151 = vmatmul.f32.gmra.mxu0 %v103
    %v152 = vpop.f32.mrf.mxu0
    %v153 = vadd.f32 0.0, %v152
    %154 = vmatmul.f32.gmra.mxu0 %v104
    %v155 = vpop.f32.mrf.mxu0
    %v156 = vadd.f32 0.0, %v155
    %157 = vmatmul.f32.gmra.mxu0 %v105
    %v158 = vpop.f32.mrf.mxu0
    %v159 = vadd.f32 0.0, %v158
    %160 = vmatmul.f32.gmra.mxu0 %v106
    %v161 = vpop.f32.mrf.mxu0
    %v162 = vadd.f32 0.0, %v161
    %163 = vmatmul.f32.gmra.mxu0 %v107
    %v164 = vpop.f32.mrf.mxu0
    %v165 = vadd.f32 0.0, %v164
    %166 = vmatmul.f32.gmra.mxu0 %v108
    %v167 = vpop.f32.mrf.mxu0
    %v168 = vadd.f32 0.0, %v167
    %169 = vmatmul.f32.gmra.mxu0 %v109
    %v170 = vpop.f32.mrf.mxu0
    %v171 = vadd.f32 0.0, %v170
    %172 = vmatmul.f32.gmra.mxu0 %v110
    %v173 = vpop.f32.mrf.mxu0
    %v174 = vadd.f32 0.0, %v173
    %175 = vmatmul.f32.gmra.mxu0 %v111
    %v176 = vpop.f32.mrf.mxu0
    %v177 = vadd.f32 0.0, %v176
    %178 = vmatmul.f32.gmra.mxu0 %v112
    %v179 = vpop.f32.mrf.mxu0
    %v180 = vadd.f32 0.0, %v179
    %181 = vmatmul.f32.gmra.mxu0 %v113
    %v182 = vpop.f32.mrf.mxu0
    %v183 = vadd.f32 0.0, %v182
    %184 = vmatmul.f32.gmra.mxu0 %v114
    %v185 = vpop.f32.mrf.mxu0
    %v186 = vadd.f32 0.0, %v185
    %187 = vmatmul.f32.gmra.mxu0 %v115
    %v188 = vpop.f32.mrf.mxu0
    %v189 = vadd.f32 0.0, %v188
    %190 = vmatmul.f32.gmra.mxu0 %v116
    %v191 = vpop.f32.mrf.mxu0
    %v192 = vadd.f32 0.0, %v191
    %193 = vmatmul.f32.gmra.mxu0 %v117
    %v194 = vpop.f32.mrf.mxu0
    %v195 = vadd.f32 0.0, %v194
    %196 = vmatmul.f32.gmra.mxu0 %v118
    %v197 = vpop.f32.mrf.mxu0
    %v198 = vadd.f32 0.0, %v197
    %199 = vdwg.mxu0
    %v200 = vld [vmem:[%s3] sm:$0x1]
    %v202 = vperm.slane %v200, 0
    %204 = vmatpush.msra.mxu0 %v198
    %205 = vmatpush.msra.mxu0 %v195
    %206 = vmatpush.msra.mxu0 %v192
    %207 = vmatpush.msra.mxu0 %v189
    %208 = vmatpush.msra.mxu0 %v186
    %209 = vmatpush.msra.mxu0 %v183
    %210 = vmatpush.msra.mxu0 %v180
    %211 = vmatpush.msra.mxu0 %v177
    %212 = vmatpush.msra.mxu0 %v174
    %213 = vmatpush.msra.mxu0 %v171
    %214 = vmatpush.msra.mxu0 %v168
    %215 = vmatpush.msra.mxu0 %v165
    %216 = vmatpush.msra.mxu0 %v162
    %217 = vmatpush.msra.mxu0 %v159
    %218 = vmatpush.msra.mxu0 %v156
    %219 = vmatpush.msra.mxu0 %v153
    %220 = vmatmul.f32.gmra.mxu0 %v87
    %v221 = vpop.f32.mrf.mxu0
    %v222 = vadd.f32 %v202, %v221
    %223 = vmatmul.f32.gmra.mxu0 %v88
    %v224 = vpop.f32.mrf.mxu0
    %v225 = vadd.f32 %v202, %v224
    %226 = vmatmul.f32.gmra.mxu0 %v89
    %v227 = vpop.f32.mrf.mxu0
    %v228 = vadd.f32 %v202, %v227
    %229 = vmatmul.f32.gmra.mxu0 %v90
    %v230 = vpop.f32.mrf.mxu0
    %v231 = vadd.f32 %v202, %v230
    %232 = vmatmul.f32.gmra.mxu0 %v91
    %v233 = vpop.f32.mrf.mxu0
    %v234 = vadd.f32 %v202, %v233
    %235 = vmatmul.f32.gmra.mxu0 %v92
    %v236 = vpop.f32.mrf.mxu0
    %v237 = vadd.f32 %v202, %v236
    %238 = vmatmul.f32.gmra.mxu0 %v93
    %v239 = vpop.f32.mrf.mxu0
    %v240 = vadd.f32 %v202, %v239
    %241 = vmatmul.f32.gmra.mxu0 %v94
    %v242 = vpop.f32.mrf.mxu0
    %v243 = vadd.f32 %v202, %v242
    %244 = vmatmul.f32.gmra.mxu0 %v95
    %v245 = vpop.f32.mrf.mxu0
    %v246 = vadd.f32 %v202, %v245
    %247 = vmatmul.f32.gmra.mxu0 %v96
    %v248 = vpop.f32.mrf.mxu0
    %v249 = vadd.f32 %v202, %v248
    %250 = vmatmul.f32.gmra.mxu0 %v97
    %v251 = vpop.f32.mrf.mxu0
    %v252 = vadd.f32 %v202, %v251
    %253 = vmatmul.f32.gmra.mxu0 %v98
    %v254 = vpop.f32.mrf.mxu0
    %v255 = vadd.f32 %v202, %v254
    %256 = vmatmul.f32.gmra.mxu0 %v99
    %v257 = vpop.f32.mrf.mxu0
    %v258 = vadd.f32 %v202, %v257
    %259 = vmatmul.f32.gmra.mxu0 %v100
    %v260 = vpop.f32.mrf.mxu0
    %v261 = vadd.f32 %v202, %v260
    %262 = vmatmul.f32.gmra.mxu0 %v101
    %v263 = vpop.f32.mrf.mxu0
    %v264 = vadd.f32 %v202, %v263
    %265 = vmatmul.f32.gmra.mxu0 %v102
    %v266 = vpop.f32.mrf.mxu0
    %v267 = vadd.f32 %v202, %v266
    %268 = vdwg.mxu0
    %v269 = vmax.f32 %v222, 0.0
    %v270 = vmax.f32 %v225, 0.0
    %v271 = vmax.f32 %v228, 0.0
    %v272 = vmax.f32 %v231, 0.0
    %v273 = vmax.f32 %v234, 0.0
    %v274 = vmax.f32 %v237, 0.0
    %v275 = vmax.f32 %v240, 0.0
    %v276 = vmax.f32 %v243, 0.0
    %v277 = vmax.f32 %v246, 0.0
    %v278 = vmax.f32 %v249, 0.0
    %v279 = vmax.f32 %v252, 0.0
    %v280 = vmax.f32 %v255, 0.0
    %v281 = vmax.f32 %v258, 0.0
    %v282 = vmax.f32 %v261, 0.0
    %v283 = vmax.f32 %v264, 0.0
    %v284 = vmax.f32 %v267, 0.0
    %v285 = vld [vmem:[#allocation8] sm:$0xff]
    %v286 = vld [vmem:[#allocation8 + $0x8] sm:$0xff]
    %v287 = vld [vmem:[#allocation8 + $0x10] sm:$0xff]
    %v288 = vld [vmem:[#allocation8 + $0x18] sm:$0xff]
    %v289 = vld [vmem:[#allocation8 + $0x20] sm:$0xff]
    %v290 = vld [vmem:[#allocation8 + $0x28] sm:$0xff]
    %v291 = vld [vmem:[#allocation8 + $0x30] sm:$0xff]
    %v292 = vld [vmem:[#allocation8 + $0x38] sm:$0xff]
    %v293 = vld [vmem:[#allocation8 + $0x40] sm:$0xff]
    %v294 = vld [vmem:[#allocation8 + $0x48] sm:$0xff]
    %v295 = vld [vmem:[#allocation8 + $0x50] sm:$0xff]
    %v296 = vld [vmem:[#allocation8 + $0x58] sm:$0xff]
    %v297 = vld [vmem:[#allocation8 + $0x60] sm:$0xff]
    %v298 = vld [vmem:[#allocation8 + $0x68] sm:$0xff]
    %v299 = vld [vmem:[#allocation8 + $0x70] sm:$0xff]
    %v300 = vld [vmem:[#allocation8 + $0x78] sm:$0xff]
    %301 = vmatpush.msra.mxu0 %v300
    %302 = vmatpush.msra.mxu0 %v299
    %303 = vmatpush.msra.mxu0 %v298
    %304 = vmatpush.msra.mxu0 %v297
    %305 = vmatpush.msra.mxu0 %v296
    %306 = vmatpush.msra.mxu0 %v295
    %307 = vmatpush.msra.mxu0 %v294
    %308 = vmatpush.msra.mxu0 %v293
    %309 = vmatpush.msra.mxu0 %v292
    %310 = vmatpush.msra.mxu0 %v291
    %311 = vmatpush.msra.mxu0 %v290
    %312 = vmatpush.msra.mxu0 %v289
    %313 = vmatpush.msra.mxu0 %v288
    %314 = vmatpush.msra.mxu0 %v287
    %315 = vmatpush.msra.mxu0 %v286
    %316 = vmatpush.msra.mxu0 %v285
    %317 = vmatmul.f32.gmra.mxu0 %v269
    %v318 = vpop.f32.mrf.mxu0
    %v319 = vadd.f32 0.0, %v318
    %320 = vmatmul.f32.gmra.mxu0 %v270
    %v321 = vpop.f32.mrf.mxu0
    %v322 = vadd.f32 0.0, %v321
    %323 = vmatmul.f32.gmra.mxu0 %v271
    %v324 = vpop.f32.mrf.mxu0
    %v325 = vadd.f32 0.0, %v324
    %326 = vmatmul.f32.gmra.mxu0 %v272
    %v327 = vpop.f32.mrf.mxu0
    %v328 = vadd.f32 0.0, %v327
    %329 = vmatmul.f32.gmra.mxu0 %v273
    %v330 = vpop.f32.mrf.mxu0
    %v331 = vadd.f32 0.0, %v330
    %332 = vmatmul.f32.gmra.mxu0 %v274
    %v333 = vpop.f32.mrf.mxu0
    %v334 = vadd.f32 0.0, %v333
    %335 = vmatmul.f32.gmra.mxu0 %v275
    %v336 = vpop.f32.mrf.mxu0
    %v337 = vadd.f32 0.0, %v336
    %338 = vmatmul.f32.gmra.mxu0 %v276
    %v339 = vpop.f32.mrf.mxu0
    %v340 = vadd.f32 0.0, %v339
    %341 = vmatmul.f32.gmra.mxu0 %v277
    %v342 = vpop.f32.mrf.mxu0
    %v343 = vadd.f32 0.0, %v342
    %344 = vmatmul.f32.gmra.mxu0 %v278
    %v345 = vpop.f32.mrf.mxu0
    %v346 = vadd.f32 0.0, %v345
    %347 = vmatmul.f32.gmra.mxu0 %v279
    %v348 = vpop.f32.mrf.mxu0
    %v349 = vadd.f32 0.0, %v348
    %350 = vmatmul.f32.gmra.mxu0 %v280
    %v351 = vpop.f32.mrf.mxu0
    %v352 = vadd.f32 0.0, %v351
    %353 = vmatmul.f32.gmra.mxu0 %v281
    %v354 = vpop.f32.mrf.mxu0
    %v355 = vadd.f32 0.0, %v354
    %356 = vmatmul.f32.gmra.mxu0 %v282
    %v357 = vpop.f32.mrf.mxu0
    %v358 = vadd.f32 0.0, %v357
    %359 = vmatmul.f32.gmra.mxu0 %v283
    %v360 = vpop.f32.mrf.mxu0
    %v361 = vadd.f32 0.0, %v360
    %362 = vmatmul.f32.gmra.mxu0 %v284
    %v363 = vpop.f32.mrf.mxu0
    %v364 = vadd.f32 0.0, %v363
    %365 = vdwg.mxu0
    %v366 = vld [vmem:[%s5] sm:$0x1]
    %v368 = vperm.slane %v366, 0
    %370 = vmatpush.msra.mxu0 %v364
    %371 = vmatpush.msra.mxu0 %v361
    %372 = vmatpush.msra.mxu0 %v358
    %373 = vmatpush.msra.mxu0 %v355
    %374 = vmatpush.msra.mxu0 %v352
    %375 = vmatpush.msra.mxu0 %v349
    %376 = vmatpush.msra.mxu0 %v346
    %377 = vmatpush.msra.mxu0 %v343
    %378 = vmatpush.msra.mxu0 %v340
    %379 = vmatpush.msra.mxu0 %v337
    %380 = vmatpush.msra.mxu0 %v334
    %381 = vmatpush.msra.mxu0 %v331
    %382 = vmatpush.msra.mxu0 %v328
    %383 = vmatpush.msra.mxu0 %v325
    %384 = vmatpush.msra.mxu0 %v322
    %385 = vmatpush.msra.mxu0 %v319
    %386 = vmatmul.f32.gmra.mxu0 %v87
    %v387 = vpop.f32.mrf.mxu0
    %v388 = vadd.f32 %v368, %v387
    %389 = vmatmul.f32.gmra.mxu0 %v88
    %v390 = vpop.f32.mrf.mxu0
    %v391 = vadd.f32 %v368, %v390
    %392 = vmatmul.f32.gmra.mxu0 %v89
    %v393 = vpop.f32.mrf.mxu0
    %v394 = vadd.f32 %v368, %v393
    %395 = vmatmul.f32.gmra.mxu0 %v90
    %v396 = vpop.f32.mrf.mxu0
    %v397 = vadd.f32 %v368, %v396
    %398 = vmatmul.f32.gmra.mxu0 %v91
    %v399 = vpop.f32.mrf.mxu0
    %v400 = vadd.f32 %v368, %v399
    %401 = vmatmul.f32.gmra.mxu0 %v92
    %v402 = vpop.f32.mrf.mxu0
    %v403 = vadd.f32 %v368, %v402
    %404 = vmatmul.f32.gmra.mxu0 %v93
    %v405 = vpop.f32.mrf.mxu0
    %v406 = vadd.f32 %v368, %v405
    %407 = vmatmul.f32.gmra.mxu0 %v94
    %v408 = vpop.f32.mrf.mxu0
    %v409 = vadd.f32 %v368, %v408
    %410 = vmatmul.f32.gmra.mxu0 %v95
    %v411 = vpop.f32.mrf.mxu0
    %v412 = vadd.f32 %v368, %v411
    %413 = vmatmul.f32.gmra.mxu0 %v96
    %v414 = vpop.f32.mrf.mxu0
    %v415 = vadd.f32 %v368, %v414
    %416 = vmatmul.f32.gmra.mxu0 %v97
    %v417 = vpop.f32.mrf.mxu0
    %v418 = vadd.f32 %v368, %v417
    %419 = vmatmul.f32.gmra.mxu0 %v98
    %v420 = vpop.f32.mrf.mxu0
    %v421 = vadd.f32 %v368, %v420
    %422 = vmatmul.f32.gmra.mxu0 %v99
    %v423 = vpop.f32.mrf.mxu0
    %v424 = vadd.f32 %v368, %v423
    %425 = vmatmul.f32.gmra.mxu0 %v100
    %v426 = vpop.f32.mrf.mxu0
    %v427 = vadd.f32 %v368, %v426
    %428 = vmatmul.f32.gmra.mxu0 %v101
    %v429 = vpop.f32.mrf.mxu0
    %v430 = vadd.f32 %v368, %v429
    %431 = vmatmul.f32.gmra.mxu0 %v102
    %v432 = vpop.f32.mrf.mxu0
    %v433 = vadd.f32 %v368, %v432
    %434 = vdwg.mxu0
    %435 = vst [vmem:[#allocation10] sm:$0xff] %v388
    %436 = vst [vmem:[#allocation10 + $0x8] sm:$0xff] %v391
    %437 = vst [vmem:[#allocation10 + $0x10] sm:$0xff] %v394
    %438 = vst [vmem:[#allocation10 + $0x18] sm:$0xff] %v397
    %439 = vst [vmem:[#allocation10 + $0x20] sm:$0xff] %v400
    %440 = vst [vmem:[#allocation10 + $0x28] sm:$0xff] %v403
    %441 = vst [vmem:[#allocation10 + $0x30] sm:$0xff] %v406
    %442 = vst [vmem:[#allocation10 + $0x38] sm:$0xff] %v409
    %443 = vst [vmem:[#allocation10 + $0x40] sm:$0xff] %v412
    %444 = vst [vmem:[#allocation10 + $0x48] sm:$0xff] %v415
    %445 = vst [vmem:[#allocation10 + $0x50] sm:$0xff] %v418
    %446 = vst [vmem:[#allocation10 + $0x58] sm:$0xff] %v421
    %447 = vst [vmem:[#allocation10 + $0x60] sm:$0xff] %v424
    %448 = vst [vmem:[#allocation10 + $0x68] sm:$0xff] %v427
    %449 = vst [vmem:[#allocation10 + $0x70] sm:$0xff] %v430
    %450 = vst [vmem:[#allocation10 + $0x78] sm:$0xff] %v433
    // Predicated region
    $region42: #{tpu_custom_call.1} parent=1 // pred_check
      _
    $region43: #{tpu_custom_call.1} parent=1 // pred_check_branch
      %452 = sbr.rel (0) target = $region45
    $region44: #{tpu_custom_call.1} parent=1 // pred_region
      %454 = vsyncadd [#allocation4], 0
      %s455 = sshll.u32 [#allocation10], 4
      %s456 = int_to_ptr.vmem [resolvable:$true] %s455
      %s457 = sshll.u32 %s6, 4
      %s458 = int_to_ptr.hbm [resolvable:$true] %s457
      %463 = dma.vmem_to_hbm [thread:$0]  %s456, 2048, %s458, [#allocation4], 128, 128, 8
    $region45: #{tpu_custom_call.1} parent=1 // pred_fallthru
      _
    // Predicated region
    $region46: #{tpu_custom_call.1} parent=1 // pred_check
      _
    $region47: #{tpu_custom_call.1} parent=1 // pred_check_branch
      %465 = sbr.rel (0) target = $region49
    $region48: #{tpu_custom_call.1} parent=1 // pred_region
      %467 = dma.done [#allocation4], 2048
    $region49: #{tpu_custom_call.1} parent=1 // pred_fallthru
      _
    %468 = vsyncpa [#allocation3], 1
    %469 = vsyncpa [#allocation6], 1
    %470 = vsyncpa [#allocation9], 1
    %471 = vsyncpa [#allocation4], 1

</llo_original>
